<compile_context>
chip_gen: v7x
topology: tpu7x:2x2x1
jax: 0.10.0
libtpu: 0.0.40
codegen_flags: <defaults>
</compile_context>

<pallas_src>
import functools

import jax
import jax.numpy as jnp
from jax import lax
from jax.experimental import pallas as pl
from jax.experimental.pallas import tpu as pltpu

NEG_INF = -1e30
_VMEM_LIMIT = 48 * 1024 * 1024  # fits v5e/v6e (128 MiB) and leaves headroom on v7x (64 MiB)


# ----------------------------------------------------------------------------
# helpers
# ----------------------------------------------------------------------------

def _round_up(x, m):
    return ((x + m - 1) // m) * m


def _pick_tile(size, preferred, align):
    """Largest tile <= preferred (multiple of `align`) dividing round_up(size, align)."""
    size_r = _round_up(max(int(size), 1), align)
    t = min(_round_up(preferred, align), size_r)
    while size_r % t != 0:
        t -= align
    return t


def _pad2d(x, rows, cols):
    r, c = x.shape
    if r == rows and c == cols:
        return x
    return jnp.pad(x, ((0, rows - r), (0, cols - c)))


def _is_v5():
    try:
        return "v5" in jax.devices()[0].device_kind.lower()
    except Exception:
        return False


# ----------------------------------------------------------------------------
# Tiled matmul (QKV / O projections)
# ----------------------------------------------------------------------------

def _matmul_kernel_acc(x_ref, w_ref, o_ref, acc_ref):
    @pl.when(pl.program_id(2) == 0)
    def _init():
        acc_ref[...] = jnp.zeros_like(acc_ref)

    acc_ref[...] += jnp.dot(x_ref[...], w_ref[...],
                            preferred_element_type=jnp.float32)

    @pl.when(pl.program_id(2) == pl.num_programs(2) - 1)
    def _done():
        o_ref[...] = acc_ref[...].astype(o_ref.dtype)


def _matmul_kernel_single(x_ref, w_ref, o_ref):
    o_ref[...] = jnp.dot(x_ref[...], w_ref[...],
                         preferred_element_type=jnp.float32).astype(o_ref.dtype)


def pallas_matmul(x, w, *, out_dtype=jnp.bfloat16, tm=512, tn=512, tk=512):
    M, K = x.shape
    K2, N = w.shape
    assert K == K2
    tm = _pick_tile(M, tm, 8)
    tn = _pick_tile(N, tn, 128)
    tk = _pick_tile(K, tk, 128)
    Mp, Kp, Np = _round_up(M, tm), _round_up(K, tk), _round_up(N, tn)
    xp = _pad2d(x.astype(jnp.bfloat16), Mp, Kp)
    wp = _pad2d(w.astype(jnp.bfloat16), Kp, Np)

    if Kp == tk:  # single K step: no accumulator scratch, no init/finalize gating
        out = pl.pallas_call(
            _matmul_kernel_single,
            grid=(Mp // tm, Np // tn),
            in_specs=[pl.BlockSpec((tm, tk), lambda i, j: (i, 0)),
                      pl.BlockSpec((tk, tn), lambda i, j: (0, j))],
            out_specs=pl.BlockSpec((tm, tn), lambda i, j: (i, j)),
            out_shape=jax.ShapeDtypeStruct((Mp, Np), out_dtype),
            compiler_params=pltpu.CompilerParams(
                dimension_semantics=("parallel", "parallel"),
                vmem_limit_bytes=_VMEM_LIMIT),
        )(xp, wp)
    else:
        out = pl.pallas_call(
            _matmul_kernel_acc,
            grid=(Mp // tm, Np // tn, Kp // tk),
            in_specs=[pl.BlockSpec((tm, tk), lambda i, j, k: (i, k)),
                      pl.BlockSpec((tk, tn), lambda i, j, k: (k, j))],
            out_specs=pl.BlockSpec((tm, tn), lambda i, j, k: (i, j)),
            out_shape=jax.ShapeDtypeStruct((Mp, Np), out_dtype),
            scratch_shapes=[pltpu.VMEM((tm, tn), jnp.float32)],
            compiler_params=pltpu.CompilerParams(
                dimension_semantics=("parallel", "parallel", "arbitrary"),
                vmem_limit_bytes=_VMEM_LIMIT),
        )(xp, wp)
    if (Mp, Np) != (M, N):
        out = out[:M, :N]
    return out


# ----------------------------------------------------------------------------
# RMSNorm / fused residual-add + RMSNorm (token-tiled, HBM-bound -> wide tiles)
# ----------------------------------------------------------------------------

def _rmsnorm_kernel(x_ref, w_ref, o_ref, *, eps):
    x = x_ref[...].astype(jnp.float32)
    var = jnp.mean(x * x, axis=-1, keepdims=True)
    o_ref[...] = (x * lax.rsqrt(var + eps) * w_ref[...]).astype(o_ref.dtype)


def pallas_rmsnorm(x, w, eps, *, out_dtype=jnp.bfloat16, tt=512):
    T, H = x.shape
    tt = _pick_tile(T, tt, 8)
    Tp = _round_up(T, tt)
    xp = _pad2d(x, Tp, H)
    w2 = w.reshape(1, H).astype(jnp.float32)
    out = pl.pallas_call(
        functools.partial(_rmsnorm_kernel, eps=eps),
        grid=(Tp // tt,),
        in_specs=[pl.BlockSpec((tt, H), lambda i: (i, 0)),
                  pl.BlockSpec((1, H), lambda i: (0, 0))],
        out_specs=pl.BlockSpec((tt, H), lambda i: (i, 0)),
        out_shape=jax.ShapeDtypeStruct((Tp, H), out_dtype),
        compiler_params=pltpu.CompilerParams(
            dimension_semantics=("parallel",)),
    )(xp, w2)
    return out[:T] if Tp != T else out


def _add_rmsnorm_kernel(x_ref, r_ref, w_ref, o_ref, res_ref, *, eps):
    s = x_ref[...].astype(jnp.float32) + r_ref[...].astype(jnp.float32)
    res_ref[...] = s.astype(res_ref.dtype)       # bf16 residual stream (vLLM dtype)
    var = jnp.mean(s * s, axis=-1, keepdims=True)
    o_ref[...] = (s * lax.rsqrt(var + eps) * w_ref[...]).astype(o_ref.dtype)


def pallas_add_rmsnorm(x, residual, w, eps, *, out_dtype=jnp.bfloat16, tt=512):
    """vLLM fused residual-add + RMSNorm: returns (normed, new_residual)."""
    T, H = x.shape
    tt = _pick_tile(T, tt, 8)
    Tp = _round_up(T, tt)
    xp = _pad2d(x, Tp, H)
    rp = _pad2d(residual.astype(jnp.bfloat16), Tp, H)
    w2 = w.reshape(1, H).astype(jnp.float32)
    normed, new_res = pl.pallas_call(
        functools.partial(_add_rmsnorm_kernel, eps=eps),
        grid=(Tp // tt,),
        in_specs=[pl.BlockSpec((tt, H), lambda i: (i, 0)),
                  pl.BlockSpec((tt, H), lambda i: (i, 0)),
                  pl.BlockSpec((1, H), lambda i: (0, 0))],
        out_specs=(pl.BlockSpec((tt, H), lambda i: (i, 0)),
                   pl.BlockSpec((tt, H), lambda i: (i, 0))),
        out_shape=(jax.ShapeDtypeStruct((Tp, H), out_dtype),
                   jax.ShapeDtypeStruct((Tp, H), jnp.bfloat16)),
        input_output_aliases={1: 1},   # residual updated in place
        compiler_params=pltpu.CompilerParams(
            dimension_semantics=("parallel",)),
    )(xp, rp, w2)
    if Tp != T:
        return normed[:T], new_res[:T]
    return normed, new_res


# ----------------------------------------------------------------------------
# RoPE epilogue: rotate the Q/K head columns of the fused QKV slab, once.
# ----------------------------------------------------------------------------

def _rope_kernel(x_ref, cos_ref, sin_ref, o_ref, *, half):
    x = x_ref[...].astype(jnp.float32)
    # rotate-half via lane slice + concat (sign is folded into the sin table)
    x_rot = jnp.concatenate([x[:, half:], x[:, :half]], axis=-1)
    o_ref[...] = (x * cos_ref[...] + x_rot * sin_ref[...]).astype(o_ref.dtype)


def pallas_rope_qk(qkv, cos, sin, num_heads, head_dim, *, tt=256):
    """Neox RoPE applied to the Q and K head columns of qkv = [T, 3*nH*D].

    Returns [T, 2*nH*D] (rotated Q heads, then rotated K heads, head-major).
    The V columns of qkv are never DMA'd by this kernel."""
    T = qkv.shape[0]
    D = head_dim
    assert D % 128 == 0, "head_dim must be lane-aligned (multiple of 128)"
    tt = _pick_tile(T, tt, 8)
    Tp = _round_up(T, tt)
    qkvp = _pad2d(qkv, Tp, qkv.shape[1])
    cosp = _pad2d(cos.astype(jnp.float32), Tp, D)
    sinp = _pad2d(sin.astype(jnp.float32), Tp, D)
    out = pl.pallas_call(
        functools.partial(_rope_kernel, half=D // 2),
        grid=(Tp // tt, 2 * num_heads),
        in_specs=[pl.BlockSpec((tt, D), lambda i, h: (i, h)),
                  pl.BlockSpec((tt, D), lambda i, h: (i, 0)),
                  pl.BlockSpec((tt, D), lambda i, h: (i, 0))],
        out_specs=pl.BlockSpec((tt, D), lambda i, h: (i, h)),
        out_shape=jax.ShapeDtypeStruct((Tp, 2 * num_heads * D), jnp.bfloat16),
        compiler_params=pltpu.CompilerParams(
            dimension_semantics=("parallel", "parallel")),
    )(qkvp, cosp, sinp)
    return out[:T] if Tp != T else out


# ----------------------------------------------------------------------------
# Flash-style causal attention (RoPE pre-applied; 2-D slab head addressing)
# ----------------------------------------------------------------------------

def _flash_attn_kernel(q_ref, k_ref, v_ref, o_ref, m_ref, l_ref, acc_ref, *, sm_scale):
    i = pl.program_id(1)   # q tile
    j = pl.program_id(2)   # kv tile

    @pl.when(j == 0)
    def _init():
        m_ref[...] = jnp.full_like(m_ref, NEG_INF)
        l_ref[...] = jnp.zeros_like(l_ref)
        acc_ref[...] = jnp.zeros_like(acc_ref)

    def _scores():
        # bf16 MXU inputs, f32 accumulation; q/k already RoPE-rotated.
        return lax.dot_general(q_ref[...], k_ref[...],
                               (((1,), (1,)), ((), ())),
                               preferred_element_type=jnp.float32) * sm_scale

    def _update(s):
        m_prev = m_ref[...]
        m_new = jnp.maximum(m_prev, jnp.max(s, axis=-1, keepdims=True))
        alpha = jnp.exp(m_prev - m_new)
        p = jnp.exp(s - m_new)
        l_ref[...] = alpha * l_ref[...] + jnp.sum(p, axis=-1, keepdims=True)
        acc_ref[...] = alpha * acc_ref[...] + jnp.dot(
            p.astype(jnp.bfloat16), v_ref[...], preferred_element_type=jnp.float32)
        m_ref[...] = m_new

    @pl.when(j < i)            # fully below the diagonal: no mask needed
    def _off_diag():
        _update(_scores())

    @pl.when(j == i)           # diagonal tile: build + apply the causal mask
    def _diag():
        s = _scores()
        tq, tkv = s.shape
        rows = lax.broadcasted_iota(jnp.int32, (tq, tkv), 0)
        cols = lax.broadcasted_iota(jnp.int32, (tq, tkv), 1)
        _update(jnp.where(cols <= rows, s, NEG_INF))

    # (j > i: fully masked -> compute skipped; K/V index_map is clamped so no DMA either)

    @pl.when(j == pl.num_programs(2) - 1)
    def _finalize():
        o_ref[...] = (acc_ref[...] / l_ref[...]).astype(o_ref.dtype)  # exact divide


def pallas_flash_attention(qk_rot, qkv, num_heads, head_dim, *, t=None):
    """qk_rot: [T, 2*nH*D] (rotated Q|K); qkv: [T, 3*nH*D] (V read from its columns).

    Returns attention output [T, nH*D] (head-major), ready for the O projection."""
    T = qk_rot.shape[0]
    nH, D = num_heads, head_dim
    assert D % 128 == 0
    sm_scale = 1.0 / (D ** 0.5)
    if t is None:
        t = 128 if _is_v5() else 256   # match 128x128 MXU on v5e, 256x256 on v6e/v7x
    t = _pick_tile(T, t, 128)
    Tp = _round_up(T, t)
    qkp = _pad2d(qk_rot, Tp, qk_rot.shape[1])
    qkvp = _pad2d(qkv, Tp, qkv.shape[1])
    nt = Tp // t

    out = pl.pallas_call(
        functools.partial(_flash_attn_kernel, sm_scale=sm_scale),
        grid=(nH, nt, nt),
        in_specs=[
            # q head h, query tile i
            pl.BlockSpec((t, D), lambda h, i, j: (i, h)),
            # k head h, kv tile clamped to the causal diagonal -> no DMA for masked tiles
            pl.BlockSpec((t, D), lambda h, i, j: (jnp.minimum(j, i), nH + h)),
            # v head h (read straight out of the fused QKV slab), same clamp
            pl.BlockSpec((t, D), lambda h, i, j: (jnp.minimum(j, i), 2 * nH + h)),
        ],
        out_specs=pl.BlockSpec((t, D), lambda h, i, j: (i, h)),
        out_shape=jax.ShapeDtypeStruct((Tp, nH * D), jnp.bfloat16),
        scratch_shapes=[pltpu.VMEM((t, 1), jnp.float32),
                        pltpu.VMEM((t, 1), jnp.float32),
                        pltpu.VMEM((t, D), jnp.float32)],
        compiler_params=pltpu.CompilerParams(
            dimension_semantics=("parallel", "parallel", "arbitrary")),
    )(qkp, qkp, qkvp)
    return out[:T] if Tp != T else out


# ----------------------------------------------------------------------------
# Fused SwiGLU MLP, tiled over the intermediate dim; per-layer scale via SMEM
# ----------------------------------------------------------------------------

def _mlp_kernel(scale_ref, x_ref, wg_ref, wu_ref, wd_ref, o_ref, acc_ref):
    j = pl.program_id(1)

    @pl.when(j == 0)
    def _init():
        acc_ref[...] = jnp.zeros_like(acc_ref)

    x = x_ref[...]
    g = jnp.dot(x, wg_ref[...], preferred_element_type=jnp.float32)
    u = jnp.dot(x, wu_ref[...], preferred_element_type=jnp.float32)
    a = (g * jax.nn.sigmoid(g)) * u                     # SiLU(gate) * up
    acc_ref[...] += jnp.dot(a.astype(jnp.bfloat16), wd_ref[...],
                            preferred_element_type=jnp.float32)

    @pl.when(j == pl.num_programs(1) - 1)
    def _done():
        # CustomLlamaDecoderLayer: hidden_states.mul_(scale)
        o_ref[...] = (acc_ref[...] * scale_ref[0]).astype(o_ref.dtype)


def pallas_mlp(x, w_gate, w_up, w_down, scale, *,
               out_dtype=jnp.bfloat16, tt=256, ti=512):
    T, H = x.shape
    I = w_gate.shape[1]
    tt = _pick_tile(T, tt, 8)
    ti = _pick_tile(I, ti, 128)
    Hp = _round_up(H, 128)
    Tp = _round_up(T, tt)
    Ip = _round_up(I, ti)
    xp = _pad2d(x.astype(jnp.bfloat16), Tp, Hp)
    wgp = _pad2d(w_gate.astype(jnp.bfloat16), Hp, Ip)
    wup = _pad2d(w_up.astype(jnp.bfloat16), Hp, Ip)
    wdp = _pad2d(w_down.astype(jnp.bfloat16), Ip, Hp)
    scale_arr = jnp.asarray([scale], dtype=jnp.float32)   # SMEM scalar -> one compile for all layers
    out = pl.pallas_call(
        _mlp_kernel,
        grid=(Tp // tt, Ip // ti),
        in_specs=[pl.BlockSpec(memory_space=pltpu.MemorySpace.SMEM),
                  pl.BlockSpec((tt, Hp), lambda i, j: (i, 0)),
                  pl.BlockSpec((Hp, ti), lambda i, j: (0, j)),
                  pl.BlockSpec((Hp, ti), lambda i, j: (0, j)),
                  pl.BlockSpec((ti, Hp), lambda i, j: (j, 0))],
        out_specs=pl.BlockSpec((tt, Hp), lambda i, j: (i, 0)),
        out_shape=jax.ShapeDtypeStruct((Tp, Hp), out_dtype),
        scratch_shapes=[pltpu.VMEM((tt, Hp), jnp.float32)],
        compiler_params=pltpu.CompilerParams(
            dimension_semantics=("parallel", "arbitrary"),
            vmem_limit_bytes=_VMEM_LIMIT),
    )(scale_arr, xp, wgp, wup, wdp)
    return out[:T, :H] if (Tp, Hp) != (T, H) else out


# ----------------------------------------------------------------------------
# JAX glue (RoPE tables, embedding gather, model assembly)
# ----------------------------------------------------------------------------

def rope_tables(positions, head_dim, base=10000.0):
    half = head_dim // 2
    inv_freq = 1.0 / (base ** (jnp.arange(half, dtype=jnp.float32) / half))
    freqs = positions.astype(jnp.float32)[:, None] * inv_freq[None, :]  # [T, half]
    cos = jnp.cos(freqs)
    sin = jnp.sin(freqs)
    cos_full = jnp.concatenate([cos, cos], axis=-1)        # [T, D]
    sin_signed = jnp.concatenate([-sin, sin], axis=-1)     # [T, D]  (sign of rotate_half folded in)
    return cos_full, sin_signed


def init_params(key, cfg):
    """Weights are created and stored in bf16 (MXU dtype) once, so no per-forward casts."""
    V, H, I, nH, D, L = (cfg['vocab_size'], cfg['hidden_size'],
                         cfg['intermediate_size'], cfg['num_heads'],
                         cfg['head_dim'], cfg['num_layers'])
    keys = jax.random.split(key, 1 + 6 * L)
    params = {
        'embed': (jax.random.normal(keys[0], (V, H), jnp.float32) * 0.02).astype(jnp.bfloat16),
        'final_norm': jnp.ones((H,), jnp.float32),
        'layers': [],
    }
    for l in range(L):
        k = keys[1 + 6 * l: 1 + 6 * (l + 1)]
        params['layers'].append({
            'input_ln': jnp.ones((H,), jnp.float32),
            'post_ln': jnp.ones((H,), jnp.float32),
            'w_qkv': (jax.random.normal(k[0], (H, 3 * nH * D), jnp.float32) * 0.02).astype(jnp.bfloat16),
            'w_o': (jax.random.normal(k[1], (nH * D, H), jnp.float32) * 0.02).astype(jnp.bfloat16),
            'w_gate': (jax.random.normal(k[2], (H, I), jnp.float32) * 0.02).astype(jnp.bfloat16),
            'w_up': (jax.random.normal(k[3], (H, I), jnp.float32) * 0.02).astype(jnp.bfloat16),
            'w_down': (jax.random.normal(k[4], (I, H), jnp.float32) * 0.02).astype(jnp.bfloat16),
        })
    return params


def llama_forward(params, input_ids, positions, cfg):
    H, nH, D, eps = (cfg['hidden_size'], cfg['num_heads'],
                     cfg['head_dim'], cfg['rms_norm_eps'])
    scales = cfg['scales']

    # VocabParallelEmbedding -> plain gather (glue; no TP here).
    hidden = jnp.take(params['embed'], input_ids, axis=0)   # [T, H] bf16
    cos, sin = rope_tables(positions, D)                     # [T, D] each, f32
    residual = None

    for li, lp in enumerate(params['layers']):
        # --- input_layernorm (fused residual add after the first layer) ---
        if residual is None:
            residual = hidden
            h = pallas_rmsnorm(hidden, lp['input_ln'], eps)
        else:
            h, residual = pallas_add_rmsnorm(hidden, residual, lp['input_ln'], eps)

        # --- self attention: fused QKV proj -> RoPE epilogue -> flash attention ---
        qkv = pallas_matmul(h, lp['w_qkv'])                  # [T, 3*nH*D] bf16
        qk_rot = pallas_rope_qk(qkv, cos, sin, nH, D)        # [T, 2*nH*D] bf16
        attn = pallas_flash_attention(qk_rot, qkv, nH, D)    # [T, nH*D]   bf16
        h = pallas_matmul(attn, lp['w_o'])                   # [T, H]      bf16

        # --- post_attention_layernorm (fused add) ---
        h, residual = pallas_add_rmsnorm(h, residual, lp['post_ln'], eps)

        # --- MLP (+ per-layer scale from CustomLlamaDecoderLayer) ---
        scale = scales[li] if li < len(scales) else 1.0
        hidden = pallas_mlp(h, lp['w_gate'], lp['w_up'], lp['w_down'], scale)

    # final norm: hidden_states, _ = self.norm(hidden_states, residual)
    out, _ = pallas_add_rmsnorm(hidden, residual, params['final_norm'], eps)
    return out


# ----------------------------------------------------------------------------
# Main
# ----------------------------------------------------------------------------

if __name__ == "__main__":
    cfg = dict(
        vocab_size=512,
        hidden_size=256,
        intermediate_size=512,
        num_heads=2,           # even head count -> both v7x TensorCores stay busy
        head_dim=128,          # lane-aligned head_dim
        num_layers=2,
        rms_norm_eps=1e-6,
        scales=[0.5, 1.5],
    )
    T = 256                    # multiple of every token tile -> per-kernel padding is a no-op

    key = jax.random.PRNGKey(0)
    pkey, ikey = jax.random.split(key)
    params = init_params(pkey, cfg)
    input_ids = jax.random.randint(ikey, (T,), 0, cfg['vocab_size'], dtype=jnp.int32)
    positions = jnp.arange(T, dtype=jnp.int32)

    out = llama_forward(params, input_ids, positions, cfg)
    out = jax.block_until_ready(out)
    assert out.shape == (T, cfg['hidden_size'])
    assert bool(jnp.all(jnp.isfinite(out.astype(jnp.float32))))
    print("KERNEL_OK")
</pallas_src>

<mosaic_0001>
module attributes {stable_mosaic.version = 11 : i64} {
  func.func @_rmsnorm_kernel(%arg0: i32, %arg1: memref<256x256xbf16, #tpu.memory_space<vmem>>, %arg2: memref<1x256xf32, #tpu.memory_space<vmem>>, %arg3: memref<256x256xbf16, #tpu.memory_space<vmem>>) attributes {dimension_semantics = [#tpu.dimension_semantics<parallel>], iteration_bounds = array<i64: 1>, scalar_prefetch = 0 : i64, scratch_operands = 0 : i64, tpu.core_type = #tpu.core_type<tc>, window_params = [{transform_indices = @transform_0, window_bounds = array<i64: 256, 256>}, {pipeline_mode = #tpu.pipeline_mode<synchronous>, transform_indices = @transform_1, window_bounds = array<i64: 1, 256>}, {transform_indices = @transform_2, window_bounds = array<i64: 256, 256>}]} {
    %c0 = arith.constant 0 : index
    %c0_0 = arith.constant 0 : index
    %0 = vector.load %arg1[%c0, %c0_0] : memref<256x256xbf16, #tpu.memory_space<vmem>>, vector<256x256xbf16>
    %1 = arith.extf %0 : vector<256x256xbf16> to vector<256x256xf32>
    %2 = arith.mulf %1, %1 : vector<256x256xf32>
    %cst = arith.constant dense<0.000000e+00> : vector<256xf32>
    %3 = vector.multi_reduction <add>, %2, %cst [1] : vector<256x256xf32> to vector<256xf32>
    %4 = vector.shape_cast %3 : vector<256xf32> to vector<256x1xf32>
    %cst_1 = arith.constant 2.560000e+02 : f32
    %5 = vector.broadcast %cst_1 : f32 to vector<256x1xf32>
    %6 = arith.divf %4, %5 : vector<256x1xf32>
    %cst_2 = arith.constant 9.99999997E-7 : f32
    %7 = vector.broadcast %cst_2 : f32 to vector<256x1xf32>
    %8 = arith.addf %6, %7 : vector<256x1xf32>
    %9 = math.rsqrt %8 : vector<256x1xf32>
    %10 = vector.broadcast %9 : vector<256x1xf32> to vector<256x256xf32>
    %11 = arith.mulf %1, %10 : vector<256x256xf32>
    %c0_3 = arith.constant 0 : index
    %c0_4 = arith.constant 0 : index
    %12 = vector.load %arg2[%c0_3, %c0_4] : memref<1x256xf32, #tpu.memory_space<vmem>>, vector<1x256xf32>
    %13 = vector.broadcast %12 : vector<1x256xf32> to vector<256x256xf32>
    %14 = arith.mulf %11, %13 : vector<256x256xf32>
    %15 = arith.truncf %14 : vector<256x256xf32> to vector<256x256xbf16>
    %c0_5 = arith.constant 0 : index
    %c0_6 = arith.constant 0 : index
    %16 = vector.load %arg3[%c0_5, %c0_6] : memref<256x256xbf16, #tpu.memory_space<vmem>>, vector<256x256xbf16>
    tpu.vector_store %arg3[%c0_5, %c0_6], %15 {strides = array<i32>} : memref<256x256xbf16, #tpu.memory_space<vmem>>, vector<256x256xbf16>,
    return
  }
  func.func @transform_0(%arg0: i32) -> (i32, i32) {
    %c0_i32 = arith.constant 0 : i32
    %c0_i32_0 = arith.constant 0 : i32
    return %arg0, %c0_i32 : i32, i32
  }
  func.func @transform_1(%arg0: i32) -> (i32, i32) {
    %c0_i32 = arith.constant 0 : i32
    %c0_i32_0 = arith.constant 0 : i32
    %c0_i32_1 = arith.constant 0 : i32
    return %c0_i32, %c0_i32_0 : i32, i32
  }
  func.func @transform_2(%arg0: i32) -> (i32, i32) {
    %c0_i32 = arith.constant 0 : i32
    %c0_i32_0 = arith.constant 0 : i32
    return %arg0, %c0_i32 : i32, i32
  }
}

</mosaic_0001>

<llo_original>
// kernel: tpu_custom_call.1
$region0: #{tpu_custom_call.1}
  #allocation0 [shape = 'u32[]', space=smem, size = 0x4, offset = 0x4, fixed_abs, tag = 'smem constant byte address 0x4 - core index']
  #allocation1 [shape = 'u32[144,128]{1,0:T(1,128)}', space=vmem, size = 0x12000, scoped, tag = 'internal scratch']
  %s0 = inlined_call_operand.hbm [shape: bf16[256,256], index: 0, kind: input, shape index: {}]
  %s1 = inlined_call_operand.vmem [shape: f32[1,256], index: 1, kind: input, shape index: {}]
  %s2 = inlined_call_operand.hbm [shape: bf16[256,256], index: 2, kind: output, shape index: {}]
  %s3 = sld [smem:[#allocation0]]
  $region22: #{tpu_custom_call.1} parent=0
    _
  %s5 = ssub.s32 1, %s3
  %s6 = scalar_select 0, %s5, %s3
  $region1: #{tpu_custom_call.1} parent=0
    #allocation2 [shape = 'u8[131072]{0}', space=vmem, size = 0x20000, scoped, tag = 'input window, operand 0, single buffered']
    #allocation3 [shape = 's32[1]{0}', space=sflag, size = 0x4, scoped, tag = 'scoped memory for tpu_custom_call.1']
    #allocation4 [shape = 's32[1]{0}', space=sflag, size = 0x4, scoped, tag = 'scoped memory for tpu_custom_call.1']
    #allocation5 [shape = 'u8[131072]{0}', space=vmem, size = 0x20000, scoped, tag = 'output window, operand 0, single buffered']
    %7 = vsyncpa [#allocation3], 0
    %8 = vsyncpa [#allocation4], 0
    // Predicated region
    $region2: #{tpu_custom_call.1} parent=1 // pred_check
      _
    $region3: #{tpu_custom_call.1} parent=1 // pred_check_branch
      %10 = sbr.rel (0) target = $region5
    $region4: #{tpu_custom_call.1} parent=1 // pred_region
      %s12 = ssub.s32 4096, 4096
      %13 = vsyncadd [#allocation3], %s12
      %s14 = sshll.u32 [#allocation2], 4
      %s15 = int_to_ptr.vmem [resolvable:$true] %s14
      %20 = dma.hbm_to_vmem [thread:$0]  %s0, 4096, %s15, [#allocation3], 128, 128, 8
    $region5: #{tpu_custom_call.1} parent=1 // pred_fallthru
      _
    // Predicated region
    $region6: #{tpu_custom_call.1} parent=1 // pred_check
      _
    $region7: #{tpu_custom_call.1} parent=1 // pred_check_branch
      %22 = sbr.rel (0) target = $region9
    $region8: #{tpu_custom_call.1} parent=1 // pred_region
      _
    $region9: #{tpu_custom_call.1} parent=1 // pred_fallthru
      _
    // Predicated region
    $region10: #{tpu_custom_call.1} parent=1 // pred_check
      _
    $region11: #{tpu_custom_call.1} parent=1 // pred_check_branch
      %24 = sbr.rel (0) target = $region13
    $region12: #{tpu_custom_call.1} parent=1 // pred_region
      %25 = dma.done [#allocation3], 4096
    $region13: #{tpu_custom_call.1} parent=1 // pred_fallthru
      _
    %v26 = vld [vmem:[#allocation2] sm:$0xff]
    %v27 = vld [vmem:[#allocation2 + $0x8] sm:$0xff]
    %v28 = vld [vmem:[#allocation2 + $0x10] sm:$0xff]
    %v29 = vld [vmem:[#allocation2 + $0x18] sm:$0xff]
    %v30 = vld [vmem:[#allocation2 + $0x20] sm:$0xff]
    %v31 = vld [vmem:[#allocation2 + $0x28] sm:$0xff]
    %v32 = vld [vmem:[#allocation2 + $0x30] sm:$0xff]
    %v33 = vld [vmem:[#allocation2 + $0x38] sm:$0xff]
    %v34 = vld [vmem:[#allocation2 + $0x40] sm:$0xff]
    %v35 = vld [vmem:[#allocation2 + $0x48] sm:$0xff]
    %v36 = vld [vmem:[#allocation2 + $0x50] sm:$0xff]
    %v37 = vld [vmem:[#allocation2 + $0x58] sm:$0xff]
    %v38 = vld [vmem:[#allocation2 + $0x60] sm:$0xff]
    %v39 = vld [vmem:[#allocation2 + $0x68] sm:$0xff]
    %v40 = vld [vmem:[#allocation2 + $0x70] sm:$0xff]
    %v41 = vld [vmem:[#allocation2 + $0x78] sm:$0xff]
    %v42 = vld [vmem:[#allocation2 + $0x80] sm:$0xff]
    %v43 = vld [vmem:[#allocation2 + $0x88] sm:$0xff]
    %v44 = vld [vmem:[#allocation2 + $0x90] sm:$0xff]
    %v45 = vld [vmem:[#allocation2 + $0x98] sm:$0xff]
    %v46 = vld [vmem:[#allocation2 + $0xa0] sm:$0xff]
    %v47 = vld [vmem:[#allocation2 + $0xa8] sm:$0xff]
    %v48 = vld [vmem:[#allocation2 + $0xb0] sm:$0xff]
    %v49 = vld [vmem:[#allocation2 + $0xb8] sm:$0xff]
    %v50 = vld [vmem:[#allocation2 + $0xc0] sm:$0xff]
    %v51 = vld [vmem:[#allocation2 + $0xc8] sm:$0xff]
    %v52 = vld [vmem:[#allocation2 + $0xd0] sm:$0xff]
    %v53 = vld [vmem:[#allocation2 + $0xd8] sm:$0xff]
    %v54 = vld [vmem:[#allocation2 + $0xe0] sm:$0xff]
    %v55 = vld [vmem:[#allocation2 + $0xe8] sm:$0xff]
    %v56 = vld [vmem:[#allocation2 + $0xf0] sm:$0xff]
    %v57 = vld [vmem:[#allocation2 + $0xf8] sm:$0xff]
    %v58 = vunpack.c.l.bf16 %v26
    %v59 = vunpack.c.h.bf16 %v26
    %v60 = vunpack.c.l.bf16 %v27
    %v61 = vunpack.c.h.bf16 %v27
    %v62 = vunpack.c.l.bf16 %v28
    %v63 = vunpack.c.h.bf16 %v28
    %v64 = vunpack.c.l.bf16 %v29
    %v65 = vunpack.c.h.bf16 %v29
    %v66 = vunpack.c.l.bf16 %v30
    %v67 = vunpack.c.h.bf16 %v30
    %v68 = vunpack.c.l.bf16 %v31
    %v69 = vunpack.c.h.bf16 %v31
    %v70 = vunpack.c.l.bf16 %v32
    %v71 = vunpack.c.h.bf16 %v32
    %v72 = vunpack.c.l.bf16 %v33
    %v73 = vunpack.c.h.bf16 %v33
    %v74 = vunpack.c.l.bf16 %v34
    %v75 = vunpack.c.h.bf16 %v34
    %v76 = vunpack.c.l.bf16 %v35
    %v77 = vunpack.c.h.bf16 %v35
    %v78 = vunpack.c.l.bf16 %v36
    %v79 = vunpack.c.h.bf16 %v36
    %v80 = vunpack.c.l.bf16 %v37
    %v81 = vunpack.c.h.bf16 %v37
    %v82 = vunpack.c.l.bf16 %v38
    %v83 = vunpack.c.h.bf16 %v38
    %v84 = vunpack.c.l.bf16 %v39
    %v85 = vunpack.c.h.bf16 %v39
    %v86 = vunpack.c.l.bf16 %v40
    %v87 = vunpack.c.h.bf16 %v40
    %v88 = vunpack.c.l.bf16 %v41
    %v89 = vunpack.c.h.bf16 %v41
    %v90 = vunpack.c.l.bf16 %v42
    %v91 = vunpack.c.h.bf16 %v42
    %v92 = vunpack.c.l.bf16 %v43
    %v93 = vunpack.c.h.bf16 %v43
    %v94 = vunpack.c.l.bf16 %v44
    %v95 = vunpack.c.h.bf16 %v44
    %v96 = vunpack.c.l.bf16 %v45
    %v97 = vunpack.c.h.bf16 %v45
    %v98 = vunpack.c.l.bf16 %v46
    %v99 = vunpack.c.h.bf16 %v46
    %v100 = vunpack.c.l.bf16 %v47
    %v101 = vunpack.c.h.bf16 %v47
    %v102 = vunpack.c.l.bf16 %v48
    %v103 = vunpack.c.h.bf16 %v48
    %v104 = vunpack.c.l.bf16 %v49
    %v105 = vunpack.c.h.bf16 %v49
    %v106 = vunpack.c.l.bf16 %v50
    %v107 = vunpack.c.h.bf16 %v50
    %v108 = vunpack.c.l.bf16 %v51
    %v109 = vunpack.c.h.bf16 %v51
    %v110 = vunpack.c.l.bf16 %v52
    %v111 = vunpack.c.h.bf16 %v52
    %v112 = vunpack.c.l.bf16 %v53
    %v113 = vunpack.c.h.bf16 %v53
    %v114 = vunpack.c.l.bf16 %v54
    %v115 = vunpack.c.h.bf16 %v54
    %v116 = vunpack.c.l.bf16 %v55
    %v117 = vunpack.c.h.bf16 %v55
    %v118 = vunpack.c.l.bf16 %v56
    %v119 = vunpack.c.h.bf16 %v56
    %v120 = vunpack.c.l.bf16 %v57
    %v121 = vunpack.c.h.bf16 %v57
    %v122 = vmul.f32 %v58, %v58
    %v123 = vmul.f32 %v59, %v59
    %v124 = vmul.f32 %v60, %v60
    %v125 = vmul.f32 %v61, %v61
    %v126 = vmul.f32 %v62, %v62
    %v127 = vmul.f32 %v63, %v63
    %v128 = vmul.f32 %v64, %v64
    %v129 = vmul.f32 %v65, %v65
    %v130 = vmul.f32 %v66, %v66
    %v131 = vmul.f32 %v67, %v67
    %v132 = vmul.f32 %v68, %v68
    %v133 = vmul.f32 %v69, %v69
    %v134 = vmul.f32 %v70, %v70
    %v135 = vmul.f32 %v71, %v71
    %v136 = vmul.f32 %v72, %v72
    %v137 = vmul.f32 %v73, %v73
    %v138 = vmul.f32 %v74, %v74
    %v139 = vmul.f32 %v75, %v75
    %v140 = vmul.f32 %v76, %v76
    %v141 = vmul.f32 %v77, %v77
    %v142 = vmul.f32 %v78, %v78
    %v143 = vmul.f32 %v79, %v79
    %v144 = vmul.f32 %v80, %v80
    %v145 = vmul.f32 %v81, %v81
    %v146 = vmul.f32 %v82, %v82
    %v147 = vmul.f32 %v83, %v83
    %v148 = vmul.f32 %v84, %v84
    %v149 = vmul.f32 %v85, %v85
    %v150 = vmul.f32 %v86, %v86
    %v151 = vmul.f32 %v87, %v87
    %v152 = vmul.f32 %v88, %v88
    %v153 = vmul.f32 %v89, %v89
    %v154 = vmul.f32 %v90, %v90
    %v155 = vmul.f32 %v91, %v91
    %v156 = vmul.f32 %v92, %v92
    %v157 = vmul.f32 %v93, %v93
    %v158 = vmul.f32 %v94, %v94
    %v159 = vmul.f32 %v95, %v95
    %v160 = vmul.f32 %v96, %v96
    %v161 = vmul.f32 %v97, %v97
    %v162 = vmul.f32 %v98, %v98
    %v163 = vmul.f32 %v99, %v99
    %v164 = vmul.f32 %v100, %v100
    %v165 = vmul.f32 %v101, %v101
    %v166 = vmul.f32 %v102, %v102
    %v167 = vmul.f32 %v103, %v103
    %v168 = vmul.f32 %v104, %v104
    %v169 = vmul.f32 %v105, %v105
    %v170 = vmul.f32 %v106, %v106
    %v171 = vmul.f32 %v107, %v107
    %v172 = vmul.f32 %v108, %v108
    %v173 = vmul.f32 %v109, %v109
    %v174 = vmul.f32 %v110, %v110
    %v175 = vmul.f32 %v111, %v111
    %v176 = vmul.f32 %v112, %v112
    %v177 = vmul.f32 %v113, %v113
    %v178 = vmul.f32 %v114, %v114
    %v179 = vmul.f32 %v115, %v115
    %v180 = vmul.f32 %v116, %v116
    %v181 = vmul.f32 %v117, %v117
    %v182 = vmul.f32 %v118, %v118
    %v183 = vmul.f32 %v119, %v119
    %v184 = vmul.f32 %v120, %v120
    %v185 = vmul.f32 %v121, %v121
    %v186 = vadd.f32 %v122, %v123
    %187 = vadd.xlane.f32.xlu0 %v186
    %v188 = vpop.xlane.xlu0 %187
    %v189 = vadd.f32 %v124, %v125
    %190 = vadd.xlane.f32.xlu0 %v189
    %v191 = vpop.xlane.xlu0 %190
    %v192 = vadd.f32 %v126, %v127
    %193 = vadd.xlane.f32.xlu0 %v192
    %v194 = vpop.xlane.xlu0 %193
    %v195 = vadd.f32 %v128, %v129
    %196 = vadd.xlane.f32.xlu0 %v195
    %v197 = vpop.xlane.xlu0 %196
    %v198 = vadd.f32 %v130, %v131
    %199 = vadd.xlane.f32.xlu0 %v198
    %v200 = vpop.xlane.xlu0 %199
    %v201 = vadd.f32 %v132, %v133
    %202 = vadd.xlane.f32.xlu0 %v201
    %v203 = vpop.xlane.xlu0 %202
    %v204 = vadd.f32 %v134, %v135
    %205 = vadd.xlane.f32.xlu0 %v204
    %v206 = vpop.xlane.xlu0 %205
    %v207 = vadd.f32 %v136, %v137
    %208 = vadd.xlane.f32.xlu0 %v207
    %v209 = vpop.xlane.xlu0 %208
    %v210 = vadd.f32 %v138, %v139
    %211 = vadd.xlane.f32.xlu0 %v210
    %v212 = vpop.xlane.xlu0 %211
    %v213 = vadd.f32 %v140, %v141
    %214 = vadd.xlane.f32.xlu0 %v213
    %v215 = vpop.xlane.xlu0 %214
    %v216 = vadd.f32 %v142, %v143
    %217 = vadd.xlane.f32.xlu0 %v216
    %v218 = vpop.xlane.xlu0 %217
    %v219 = vadd.f32 %v144, %v145
    %220 = vadd.xlane.f32.xlu0 %v219
    %v221 = vpop.xlane.xlu0 %220
    %v222 = vadd.f32 %v146, %v147
    %223 = vadd.xlane.f32.xlu0 %v222
    %v224 = vpop.xlane.xlu0 %223
    %v225 = vadd.f32 %v148, %v149
    %226 = vadd.xlane.f32.xlu0 %v225
    %v227 = vpop.xlane.xlu0 %226
    %v228 = vadd.f32 %v150, %v151
    %229 = vadd.xlane.f32.xlu0 %v228
    %v230 = vpop.xlane.xlu0 %229
    %v231 = vadd.f32 %v152, %v153
    %232 = vadd.xlane.f32.xlu0 %v231
    %v233 = vpop.xlane.xlu0 %232
    %v234 = vadd.f32 %v154, %v155
    %235 = vadd.xlane.f32.xlu0 %v234
    %v236 = vpop.xlane.xlu0 %235
    %v237 = vadd.f32 %v156, %v157
    %238 = vadd.xlane.f32.xlu0 %v237
    %v239 = vpop.xlane.xlu0 %238
    %v240 = vadd.f32 %v158, %v159
    %241 = vadd.xlane.f32.xlu0 %v240
    %v242 = vpop.xlane.xlu0 %241
    %v243 = vadd.f32 %v160, %v161
    %244 = vadd.xlane.f32.xlu0 %v243
    %v245 = vpop.xlane.xlu0 %244
    %v246 = vadd.f32 %v162, %v163
    %247 = vadd.xlane.f32.xlu0 %v246
    %v248 = vpop.xlane.xlu0 %247
    %v249 = vadd.f32 %v164, %v165
    %250 = vadd.xlane.f32.xlu0 %v249
    %v251 = vpop.xlane.xlu0 %250
    %v252 = vadd.f32 %v166, %v167
    %253 = vadd.xlane.f32.xlu0 %v252
    %v254 = vpop.xlane.xlu0 %253
    %v255 = vadd.f32 %v168, %v169
    %256 = vadd.xlane.f32.xlu0 %v255
    %v257 = vpop.xlane.xlu0 %256
    %v258 = vadd.f32 %v170, %v171
    %259 = vadd.xlane.f32.xlu0 %v258
    %v260 = vpop.xlane.xlu0 %259
    %v261 = vadd.f32 %v172, %v173
    %262 = vadd.xlane.f32.xlu0 %v261
    %v263 = vpop.xlane.xlu0 %262
    %v264 = vadd.f32 %v174, %v175
    %265 = vadd.xlane.f32.xlu0 %v264
    %v266 = vpop.xlane.xlu0 %265
    %v267 = vadd.f32 %v176, %v177
    %268 = vadd.xlane.f32.xlu0 %v267
    %v269 = vpop.xlane.xlu0 %268
    %v270 = vadd.f32 %v178, %v179
    %271 = vadd.xlane.f32.xlu0 %v270
    %v272 = vpop.xlane.xlu0 %271
    %v273 = vadd.f32 %v180, %v181
    %274 = vadd.xlane.f32.xlu0 %v273
    %v275 = vpop.xlane.xlu0 %274
    %v276 = vadd.f32 %v182, %v183
    %277 = vadd.xlane.f32.xlu0 %v276
    %v278 = vpop.xlane.xlu0 %277
    %v279 = vadd.f32 %v184, %v185
    %280 = vadd.xlane.f32.xlu0 %v279
    %v281 = vpop.xlane.xlu0 %280
    %v282 = vrcp.pop 256.0
    %v283 = vmul.f32 %v188, %v282
    %v284 = vmul.f32 %v191, %v282
    %v285 = vmul.f32 %v194, %v282
    %v286 = vmul.f32 %v197, %v282
    %v287 = vmul.f32 %v200, %v282
    %v288 = vmul.f32 %v203, %v282
    %v289 = vmul.f32 %v206, %v282
    %v290 = vmul.f32 %v209, %v282
    %v291 = vmul.f32 %v212, %v282
    %v292 = vmul.f32 %v215, %v282
    %v293 = vmul.f32 %v218, %v282
    %v294 = vmul.f32 %v221, %v282
    %v295 = vmul.f32 %v224, %v282
    %v296 = vmul.f32 %v227, %v282
    %v297 = vmul.f32 %v230, %v282
    %v298 = vmul.f32 %v233, %v282
    %v299 = vmul.f32 %v236, %v282
    %v300 = vmul.f32 %v239, %v282
    %v301 = vmul.f32 %v242, %v282
    %v302 = vmul.f32 %v245, %v282
    %v303 = vmul.f32 %v248, %v282
    %v304 = vmul.f32 %v251, %v282
    %v305 = vmul.f32 %v254, %v282
    %v306 = vmul.f32 %v257, %v282
    %v307 = vmul.f32 %v260, %v282
    %v308 = vmul.f32 %v263, %v282
    %v309 = vmul.f32 %v266, %v282
    %v310 = vmul.f32 %v269, %v282
    %v311 = vmul.f32 %v272, %v282
    %v312 = vmul.f32 %v275, %v282
    %v313 = vmul.f32 %v278, %v282
    %v314 = vmul.f32 %v281, %v282
    %v315 = vadd.f32 %v283, 1e-06
    %v316 = vadd.f32 %v284, 1e-06
    %v317 = vadd.f32 %v285, 1e-06
    %v318 = vadd.f32 %v286, 1e-06
    %v319 = vadd.f32 %v287, 1e-06
    %v320 = vadd.f32 %v288, 1e-06
    %v321 = vadd.f32 %v289, 1e-06
    %v322 = vadd.f32 %v290, 1e-06
    %v323 = vadd.f32 %v291, 1e-06
    %v324 = vadd.f32 %v292, 1e-06
    %v325 = vadd.f32 %v293, 1e-06
    %v326 = vadd.f32 %v294, 1e-06
    %v327 = vadd.f32 %v295, 1e-06
    %v328 = vadd.f32 %v296, 1e-06
    %v329 = vadd.f32 %v297, 1e-06
    %v330 = vadd.f32 %v298, 1e-06
    %v331 = vadd.f32 %v299, 1e-06
    %v332 = vadd.f32 %v300, 1e-06
    %v333 = vadd.f32 %v301, 1e-06
    %v334 = vadd.f32 %v302, 1e-06
    %v335 = vadd.f32 %v303, 1e-06
    %v336 = vadd.f32 %v304, 1e-06
    %v337 = vadd.f32 %v305, 1e-06
    %v338 = vadd.f32 %v306, 1e-06
    %v339 = vadd.f32 %v307, 1e-06
    %v340 = vadd.f32 %v308, 1e-06
    %v341 = vadd.f32 %v309, 1e-06
    %v342 = vadd.f32 %v310, 1e-06
    %v343 = vadd.f32 %v311, 1e-06
    %v344 = vadd.f32 %v312, 1e-06
    %v345 = vadd.f32 %v313, 1e-06
    %v346 = vadd.f32 %v314, 1e-06
    %v347 = vrsqrt.pop %v315
    %v348 = vrsqrt.pop %v316
    %v349 = vrsqrt.pop %v317
    %v350 = vrsqrt.pop %v318
    %v351 = vrsqrt.pop %v319
    %v352 = vrsqrt.pop %v320
    %v353 = vrsqrt.pop %v321
    %v354 = vrsqrt.pop %v322
    %v355 = vrsqrt.pop %v323
    %v356 = vrsqrt.pop %v324
    %v357 = vrsqrt.pop %v325
    %v358 = vrsqrt.pop %v326
    %v359 = vrsqrt.pop %v327
    %v360 = vrsqrt.pop %v328
    %v361 = vrsqrt.pop %v329
    %v362 = vrsqrt.pop %v330
    %v363 = vrsqrt.pop %v331
    %v364 = vrsqrt.pop %v332
    %v365 = vrsqrt.pop %v333
    %v366 = vrsqrt.pop %v334
    %v367 = vrsqrt.pop %v335
    %v368 = vrsqrt.pop %v336
    %v369 = vrsqrt.pop %v337
    %v370 = vrsqrt.pop %v338
    %v371 = vrsqrt.pop %v339
    %v372 = vrsqrt.pop %v340
    %v373 = vrsqrt.pop %v341
    %v374 = vrsqrt.pop %v342
    %v375 = vrsqrt.pop %v343
    %v376 = vrsqrt.pop %v344
    %v377 = vrsqrt.pop %v345
    %v378 = vrsqrt.pop %v346
    %v379 = vmul.f32 %v58, %v347
    %v380 = vmul.f32 %v59, %v347
    %v381 = vmul.f32 %v60, %v348
    %v382 = vmul.f32 %v61, %v348
    %v383 = vmul.f32 %v62, %v349
    %v384 = vmul.f32 %v63, %v349
    %v385 = vmul.f32 %v64, %v350
    %v386 = vmul.f32 %v65, %v350
    %v387 = vmul.f32 %v66, %v351
    %v388 = vmul.f32 %v67, %v351
    %v389 = vmul.f32 %v68, %v352
    %v390 = vmul.f32 %v69, %v352
    %v391 = vmul.f32 %v70, %v353
    %v392 = vmul.f32 %v71, %v353
    %v393 = vmul.f32 %v72, %v354
    %v394 = vmul.f32 %v73, %v354
    %v395 = vmul.f32 %v74, %v355
    %v396 = vmul.f32 %v75, %v355
    %v397 = vmul.f32 %v76, %v356
    %v398 = vmul.f32 %v77, %v356
    %v399 = vmul.f32 %v78, %v357
    %v400 = vmul.f32 %v79, %v357
    %v401 = vmul.f32 %v80, %v358
    %v402 = vmul.f32 %v81, %v358
    %v403 = vmul.f32 %v82, %v359
    %v404 = vmul.f32 %v83, %v359
    %v405 = vmul.f32 %v84, %v360
    %v406 = vmul.f32 %v85, %v360
    %v407 = vmul.f32 %v86, %v361
    %v408 = vmul.f32 %v87, %v361
    %v409 = vmul.f32 %v88, %v362
    %v410 = vmul.f32 %v89, %v362
    %v411 = vmul.f32 %v90, %v363
    %v412 = vmul.f32 %v91, %v363
    %v413 = vmul.f32 %v92, %v364
    %v414 = vmul.f32 %v93, %v364
    %v415 = vmul.f32 %v94, %v365
    %v416 = vmul.f32 %v95, %v365
    %v417 = vmul.f32 %v96, %v366
    %v418 = vmul.f32 %v97, %v366
    %v419 = vmul.f32 %v98, %v367
    %v420 = vmul.f32 %v99, %v367
    %v421 = vmul.f32 %v100, %v368
    %v422 = vmul.f32 %v101, %v368
    %v423 = vmul.f32 %v102, %v369
    %v424 = vmul.f32 %v103, %v369
    %v425 = vmul.f32 %v104, %v370
    %v426 = vmul.f32 %v105, %v370
    %v427 = vmul.f32 %v106, %v371
    %v428 = vmul.f32 %v107, %v371
    %v429 = vmul.f32 %v108, %v372
    %v430 = vmul.f32 %v109, %v372
    %v431 = vmul.f32 %v110, %v373
    %v432 = vmul.f32 %v111, %v373
    %v433 = vmul.f32 %v112, %v374
    %v434 = vmul.f32 %v113, %v374
    %v435 = vmul.f32 %v114, %v375
    %v436 = vmul.f32 %v115, %v375
    %v437 = vmul.f32 %v116, %v376
    %v438 = vmul.f32 %v117, %v376
    %v439 = vmul.f32 %v118, %v377
    %v440 = vmul.f32 %v119, %v377
    %v441 = vmul.f32 %v120, %v378
    %v442 = vmul.f32 %v121, %v378
    %v443 = vld [vmem:[%s1] sm:$0x3]
    %v445 = vlaneseq
    %v446 = vshrl.u32 %v445, 7
    %v447 = vsub.s32 0, %v446
    %v448 = vrot.slane %v443, %v447
    %v449 = vlaneseq
    %v450 = vshrl.u32 %v449, 7
    %v451 = vsub.s32 1, %v450
    %v452 = vrot.slane %v443, %v451
    %v455 = vmul.f32 %v379, %v448
    %v456 = vmul.f32 %v380, %v452
    %v457 = vmul.f32 %v381, %v448
    %v458 = vmul.f32 %v382, %v452
    %v459 = vmul.f32 %v383, %v448
    %v460 = vmul.f32 %v384, %v452
    %v461 = vmul.f32 %v385, %v448
    %v462 = vmul.f32 %v386, %v452
    %v463 = vmul.f32 %v387, %v448
    %v464 = vmul.f32 %v388, %v452
    %v465 = vmul.f32 %v389, %v448
    %v466 = vmul.f32 %v390, %v452
    %v467 = vmul.f32 %v391, %v448
    %v468 = vmul.f32 %v392, %v452
    %v469 = vmul.f32 %v393, %v448
    %v470 = vmul.f32 %v394, %v452
    %v471 = vmul.f32 %v395, %v448
    %v472 = vmul.f32 %v396, %v452
    %v473 = vmul.f32 %v397, %v448
    %v474 = vmul.f32 %v398, %v452
    %v475 = vmul.f32 %v399, %v448
    %v476 = vmul.f32 %v400, %v452
    %v477 = vmul.f32 %v401, %v448
    %v478 = vmul.f32 %v402, %v452
    %v479 = vmul.f32 %v403, %v448
    %v480 = vmul.f32 %v404, %v452
    %v481 = vmul.f32 %v405, %v448
    %v482 = vmul.f32 %v406, %v452
    %v483 = vmul.f32 %v407, %v448
    %v484 = vmul.f32 %v408, %v452
    %v485 = vmul.f32 %v409, %v448
    %v486 = vmul.f32 %v410, %v452
    %v487 = vmul.f32 %v411, %v448
    %v488 = vmul.f32 %v412, %v452
    %v489 = vmul.f32 %v413, %v448
    %v490 = vmul.f32 %v414, %v452
    %v491 = vmul.f32 %v415, %v448
    %v492 = vmul.f32 %v416, %v452
    %v493 = vmul.f32 %v417, %v448
    %v494 = vmul.f32 %v418, %v452
    %v495 = vmul.f32 %v419, %v448
    %v496 = vmul.f32 %v420, %v452
    %v497 = vmul.f32 %v421, %v448
    %v498 = vmul.f32 %v422, %v452
    %v499 = vmul.f32 %v423, %v448
    %v500 = vmul.f32 %v424, %v452
    %v501 = vmul.f32 %v425, %v448
    %v502 = vmul.f32 %v426, %v452
    %v503 = vmul.f32 %v427, %v448
    %v504 = vmul.f32 %v428, %v452
    %v505 = vmul.f32 %v429, %v448
    %v506 = vmul.f32 %v430, %v452
    %v507 = vmul.f32 %v431, %v448
    %v508 = vmul.f32 %v432, %v452
    %v509 = vmul.f32 %v433, %v448
    %v510 = vmul.f32 %v434, %v452
    %v511 = vmul.f32 %v435, %v448
    %v512 = vmul.f32 %v436, %v452
    %v513 = vmul.f32 %v437, %v448
    %v514 = vmul.f32 %v438, %v452
    %v515 = vmul.f32 %v439, %v448
    %v516 = vmul.f32 %v440, %v452
    %v517 = vmul.f32 %v441, %v448
    %v518 = vmul.f32 %v442, %v452
    %v519 = vpack.c.bf16 %v457, %v455
    %v520 = vpack.c.bf16 %v458, %v456
    %v521 = vpack.c.bf16 %v461, %v459
    %v522 = vpack.c.bf16 %v462, %v460
    %v523 = vpack.c.bf16 %v465, %v463
    %v524 = vpack.c.bf16 %v466, %v464
    %v525 = vpack.c.bf16 %v469, %v467
    %v526 = vpack.c.bf16 %v470, %v468
    %v527 = vpack.c.bf16 %v473, %v471
    %v528 = vpack.c.bf16 %v474, %v472
    %v529 = vpack.c.bf16 %v477, %v475
    %v530 = vpack.c.bf16 %v478, %v476
    %v531 = vpack.c.bf16 %v481, %v479
    %v532 = vpack.c.bf16 %v482, %v480
    %v533 = vpack.c.bf16 %v485, %v483
    %v534 = vpack.c.bf16 %v486, %v484
    %v535 = vpack.c.bf16 %v489, %v487
    %v536 = vpack.c.bf16 %v490, %v488
    %v537 = vpack.c.bf16 %v493, %v491
    %v538 = vpack.c.bf16 %v494, %v492
    %v539 = vpack.c.bf16 %v497, %v495
    %v540 = vpack.c.bf16 %v498, %v496
    %v541 = vpack.c.bf16 %v501, %v499
    %v542 = vpack.c.bf16 %v502, %v500
    %v543 = vpack.c.bf16 %v505, %v503
    %v544 = vpack.c.bf16 %v506, %v504
    %v545 = vpack.c.bf16 %v509, %v507
    %v546 = vpack.c.bf16 %v510, %v508
    %v547 = vpack.c.bf16 %v513, %v511
    %v548 = vpack.c.bf16 %v514, %v512
    %v549 = vpack.c.bf16 %v517, %v515
    %v550 = vpack.c.bf16 %v518, %v516
    %v583 = vunpack.c.l.b16 %v519
    %v584 = vunpack.c.l.b16 %v520
    %v585 = vunpack.c.h.b16 %v519
    %v586 = vunpack.c.h.b16 %v520
    %v587 = vunpack.c.l.b16 %v521
    %v588 = vunpack.c.l.b16 %v522
    %v589 = vunpack.c.h.b16 %v521
    %v590 = vunpack.c.h.b16 %v522
    %v591 = vunpack.c.l.b16 %v523
    %v592 = vunpack.c.l.b16 %v524
    %v593 = vunpack.c.h.b16 %v523
    %v594 = vunpack.c.h.b16 %v524
    %v595 = vunpack.c.l.b16 %v525
    %v596 = vunpack.c.l.b16 %v526
    %v597 = vunpack.c.h.b16 %v525
    %v598 = vunpack.c.h.b16 %v526
    %v599 = vunpack.c.l.b16 %v527
    %v600 = vunpack.c.l.b16 %v528
    %v601 = vunpack.c.h.b16 %v527
    %v602 = vunpack.c.h.b16 %v528
    %v603 = vunpack.c.l.b16 %v529
    %v604 = vunpack.c.l.b16 %v530
    %v605 = vunpack.c.h.b16 %v529
    %v606 = vunpack.c.h.b16 %v530
    %v607 = vunpack.c.l.b16 %v531
    %v608 = vunpack.c.l.b16 %v532
    %v609 = vunpack.c.h.b16 %v531
    %v610 = vunpack.c.h.b16 %v532
    %v611 = vunpack.c.l.b16 %v533
    %v612 = vunpack.c.l.b16 %v534
    %v613 = vunpack.c.h.b16 %v533
    %v614 = vunpack.c.h.b16 %v534
    %v615 = vunpack.c.l.b16 %v535
    %v616 = vunpack.c.l.b16 %v536
    %v617 = vunpack.c.h.b16 %v535
    %v618 = vunpack.c.h.b16 %v536
    %v619 = vunpack.c.l.b16 %v537
    %v620 = vunpack.c.l.b16 %v538
    %v621 = vunpack.c.h.b16 %v537
    %v622 = vunpack.c.h.b16 %v538
    %v623 = vunpack.c.l.b16 %v539
    %v624 = vunpack.c.l.b16 %v540
    %v625 = vunpack.c.h.b16 %v539
    %v626 = vunpack.c.h.b16 %v540
    %v627 = vunpack.c.l.b16 %v541
    %v628 = vunpack.c.l.b16 %v542
    %v629 = vunpack.c.h.b16 %v541
    %v630 = vunpack.c.h.b16 %v542
    %v631 = vunpack.c.l.b16 %v543
    %v632 = vunpack.c.l.b16 %v544
    %v633 = vunpack.c.h.b16 %v543
    %v634 = vunpack.c.h.b16 %v544
    %v635 = vunpack.c.l.b16 %v545
    %v636 = vunpack.c.l.b16 %v546
    %v637 = vunpack.c.h.b16 %v545
    %v638 = vunpack.c.h.b16 %v546
    %v639 = vunpack.c.l.b16 %v547
    %v640 = vunpack.c.l.b16 %v548
    %v641 = vunpack.c.h.b16 %v547
    %v642 = vunpack.c.h.b16 %v548
    %v643 = vunpack.c.l.b16 %v549
    %v644 = vunpack.c.l.b16 %v550
    %v645 = vunpack.c.h.b16 %v549
    %v646 = vunpack.c.h.b16 %v550
    %v647 = vpack.c.b16 %v584, %v583
    %v648 = vpack.c.b16 %v586, %v585
    %v649 = vpack.c.b16 %v588, %v587
    %v650 = vpack.c.b16 %v590, %v589
    %v651 = vpack.c.b16 %v592, %v591
    %v652 = vpack.c.b16 %v594, %v593
    %v653 = vpack.c.b16 %v596, %v595
    %v654 = vpack.c.b16 %v598, %v597
    %v655 = vpack.c.b16 %v600, %v599
    %v656 = vpack.c.b16 %v602, %v601
    %v657 = vpack.c.b16 %v604, %v603
    %v658 = vpack.c.b16 %v606, %v605
    %v659 = vpack.c.b16 %v608, %v607
    %v660 = vpack.c.b16 %v610, %v609
    %v661 = vpack.c.b16 %v612, %v611
    %v662 = vpack.c.b16 %v614, %v613
    %v663 = vpack.c.b16 %v616, %v615
    %v664 = vpack.c.b16 %v618, %v617
    %v665 = vpack.c.b16 %v620, %v619
    %v666 = vpack.c.b16 %v622, %v621
    %v667 = vpack.c.b16 %v624, %v623
    %v668 = vpack.c.b16 %v626, %v625
    %v669 = vpack.c.b16 %v628, %v627
    %v670 = vpack.c.b16 %v630, %v629
    %v671 = vpack.c.b16 %v632, %v631
    %v672 = vpack.c.b16 %v634, %v633
    %v673 = vpack.c.b16 %v636, %v635
    %v674 = vpack.c.b16 %v638, %v637
    %v675 = vpack.c.b16 %v640, %v639
    %v676 = vpack.c.b16 %v642, %v641
    %v677 = vpack.c.b16 %v644, %v643
    %v678 = vpack.c.b16 %v646, %v645
    %711 = vst [vmem:[#allocation5] sm:$0xff] %v647
    %712 = vst [vmem:[#allocation5 + $0x8] sm:$0xff] %v648
    %713 = vst [vmem:[#allocation5 + $0x10] sm:$0xff] %v649
    %714 = vst [vmem:[#allocation5 + $0x18] sm:$0xff] %v650
    %715 = vst [vmem:[#allocation5 + $0x20] sm:$0xff] %v651
    %716 = vst [vmem:[#allocation5 + $0x28] sm:$0xff] %v652
    %717 = vst [vmem:[#allocation5 + $0x30] sm:$0xff] %v653
    %718 = vst [vmem:[#allocation5 + $0x38] sm:$0xff] %v654
    %719 = vst [vmem:[#allocation5 + $0x40] sm:$0xff] %v655
    %720 = vst [vmem:[#allocation5 + $0x48] sm:$0xff] %v656
    %721 = vst [vmem:[#allocation5 + $0x50] sm:$0xff] %v657
    %722 = vst [vmem:[#allocation5 + $0x58] sm:$0xff] %v658
    %723 = vst [vmem:[#allocation5 + $0x60] sm:$0xff] %v659
    %724 = vst [vmem:[#allocation5 + $0x68] sm:$0xff] %v660
    %725 = vst [vmem:[#allocation5 + $0x70] sm:$0xff] %v661
    %726 = vst [vmem:[#allocation5 + $0x78] sm:$0xff] %v662
    %727 = vst [vmem:[#allocation5 + $0x80] sm:$0xff] %v663
    %728 = vst [vmem:[#allocation5 + $0x88] sm:$0xff] %v664
    %729 = vst [vmem:[#allocation5 + $0x90] sm:$0xff] %v665
    %730 = vst [vmem:[#allocation5 + $0x98] sm:$0xff] %v666
    %731 = vst [vmem:[#allocation5 + $0xa0] sm:$0xff] %v667
    %732 = vst [vmem:[#allocation5 + $0xa8] sm:$0xff] %v668
    %733 = vst [vmem:[#allocation5 + $0xb0] sm:$0xff] %v669
    %734 = vst [vmem:[#allocation5 + $0xb8] sm:$0xff] %v670
    %735 = vst [vmem:[#allocation5 + $0xc0] sm:$0xff] %v671
    %736 = vst [vmem:[#allocation5 + $0xc8] sm:$0xff] %v672
    %737 = vst [vmem:[#allocation5 + $0xd0] sm:$0xff] %v673
    %738 = vst [vmem:[#allocation5 + $0xd8] sm:$0xff] %v674
    %739 = vst [vmem:[#allocation5 + $0xe0] sm:$0xff] %v675
    %740 = vst [vmem:[#allocation5 + $0xe8] sm:$0xff] %v676
    %741 = vst [vmem:[#allocation5 + $0xf0] sm:$0xff] %v677
    %742 = vst [vmem:[#allocation5 + $0xf8] sm:$0xff] %v678
    // Predicated region
    $region14: #{tpu_custom_call.1} parent=1 // pred_check
      _
    $region15: #{tpu_custom_call.1} parent=1 // pred_check_branch
      %744 = sbr.rel (0) target = $region17
    $region16: #{tpu_custom_call.1} parent=1 // pred_region
      %s746 = ssub.s32 4096, 4096
      %747 = vsyncadd [#allocation4], %s746
      %s748 = sshll.u32 [#allocation5], 4
      %s749 = int_to_ptr.vmem [resolvable:$true] %s748
      %754 = dma.vmem_to_hbm [thread:$0]  %s749, 4096, %s2, [#allocation4], 128, 128, 8
    $region17: #{tpu_custom_call.1} parent=1 // pred_fallthru
      _
    // Predicated region
    $region18: #{tpu_custom_call.1} parent=1 // pred_check
      _
    $region19: #{tpu_custom_call.1} parent=1 // pred_check_branch
      %756 = sbr.rel (0) target = $region21
    $region20: #{tpu_custom_call.1} parent=1 // pred_region
      %757 = dma.done [#allocation4], 4096
    $region21: #{tpu_custom_call.1} parent=1 // pred_fallthru
      _
    %758 = vsyncpa [#allocation3], 1
    %759 = vsyncpa [#allocation4], 1

</llo_original>
